<compile_context>
chip_gen: v5e
topology: v5e:2x2
jax: 0.10.0
libtpu: 0.0.40
codegen_flags: <defaults>
</compile_context>

<pallas_src>
import functools

import jax
import jax.numpy as jnp
from jax import lax
from jax.experimental import pallas as pl
from jax.experimental.pallas import tpu as pltpu

EPS = 1e-5


def resnet_block_kernel(x_ref, w1_ref, w2_ref, o_ref, hcat_ref,
                        *, H, W, C, eps):
    """Fused ResnetBlock for one batch element.

    x_ref:    (1, C, H*W)   input / residual (NCHW flattened, lane-dense), f32
    w*_ref:   (3C, 3C)      packed weights, [kh*C + cout, kw*C + cin], matmul dtype
    o_ref:    (1, C, H*W)   output, f32
    hcat_ref: (3C, H*W)     VMEM scratch for the im2col RHS, matmul dtype
    (C here is the padded, sublane-aligned channel count.)
    """
    HW = H * W
    mm_dtype = hcat_ref.dtype
    x = x_ref[0]                                  # (C, HW) f32

    # Boundary masks built in-kernel (no col-index input / DMA needed).
    idx = lax.broadcasted_iota(jnp.int32, (1, HW), 1)
    if (W & (W - 1)) == 0:                        # power-of-two width: free AND
        col = idx & (W - 1)
    else:                                         # generic fallback
        col = idx % W
    col_first = col == 0
    col_last = col == (W - 1)
    row_first = idx < W                           # row i == 0
    row_last = idx >= (H - 1) * W                 # row i == H-1

    def shift(v, k):
        # value[p] = v[(p + k) mod HW].  Positions where the cyclic wrap (or a
        # row-boundary crossing) would be wrong are exactly the positions the
        # reflect masks below overwrite, so the wrap is harmless.
        return pltpu.roll(v, (-k) % HW, axis=1)

    def conv3x3_reflect_instnorm(v, w_ref):
        # ---- horizontal taps (kw = 0,1,2 -> dw = -1,0,+1), reflect at cols.
        p1 = shift(v, 1)     # v[:, i, j+1] in the interior
        m1 = shift(v, -1)    # v[:, i, j-1] in the interior
        hcat_ref[0:C, :] = jnp.where(col_first, p1, m1).astype(mm_dtype)  # refl(j-1)
        hcat_ref[C:2 * C, :] = v.astype(mm_dtype)                         # j
        hcat_ref[2 * C:3 * C, :] = jnp.where(col_last, m1, p1).astype(mm_dtype)  # refl(j+1)

        # ---- one fused MXU contraction: (3C,3C) x (3C,HW) -> (3C,HW) f32.
        t = jnp.dot(w_ref[...], hcat_ref[...],
                    preferred_element_type=jnp.float32)
        t0 = t[0:C]          # kernel row kh=0 (input row i-1)  -- free slices:
        t1 = t[C:2 * C]      # kernel row kh=1 (input row i)       C is a
        t2 = t[2 * C:3 * C]  # kernel row kh=2 (input row i+1)     multiple of 8/16

        # ---- vertical taps (kh -> dh = -1,0,+1), reflect at first/last row.
        y = t1
        y = y + jnp.where(row_first, shift(t0, W), shift(t0, -W))   # refl(i-1)
        y = y + jnp.where(row_last, shift(t2, -W), shift(t2, W))    # refl(i+1)

        # ---- InstanceNorm2d (affine=False), one-pass stats, biased variance.
        # Conv bias omitted: IN(y + b) == IN(y) per channel.
        mean = jnp.mean(y, axis=1, keepdims=True)
        var = jnp.mean(y * y, axis=1, keepdims=True) - mean * mean
        var = jnp.maximum(var, 0.0)               # guard one-pass cancellation
        return (y - mean) * lax.rsqrt(var + eps)

    h = jnp.maximum(conv3x3_reflect_instnorm(x, w1_ref), 0.0)   # ReLU
    o_ref[0] = x + conv3x3_reflect_instnorm(h, w2_ref)          # residual add


def resnet_block_forward(x, w1, b1, w2, b2, *, matmul_dtype=jnp.bfloat16):
    """x: (B, C, H, W) NCHW float32; w*: (C, C, 3, 3) PyTorch OIHW; b*: (C,).

    Biases are accepted for API parity but unused: InstanceNorm cancels them.
    matmul_dtype: dtype of the MXU operands (weights + im2col scratch);
    accumulation and all normalization math stays f32.
    """
    del b1, b2  # IN(conv + b) == IN(conv): bias is mathematically a no-op here.
    B, C, H, W = x.shape
    HW = H * W

    # Pad channels to the sublane-tile multiple of the matmul dtype so every
    # hcat store / result slice is an unmasked full-tile op.
    align = 16 if jnp.dtype(matmul_dtype) == jnp.dtype(jnp.bfloat16) else 8
    Cp = ((C + align - 1) // align) * align

    x_flat = jnp.pad(x, ((0, 0), (0, Cp - C), (0, 0), (0, 0))).reshape(B, Cp, HW)

    # (C_out, C_in, kh, kw) -> single (3*Cp, 3*Cp) slab:
    # row = kh*Cp + cout, col = kw*Cp + cin  (one fused contraction per conv).
    def pack(w):
        wp = jnp.pad(w, ((0, Cp - C), (0, Cp - C), (0, 0), (0, 0)))
        return (jnp.transpose(wp, (2, 0, 3, 1))
                .reshape(3 * Cp, 3 * Cp).astype(matmul_dtype))

    w1p, w2p = pack(w1), pack(w2)

    # Explicit scoped-VMEM budget: blocks (double-buffered) + single-buffered
    # weights + hcat scratch + f32 live temporaries, with headroom.
    mm_bytes = jnp.dtype(matmul_dtype).itemsize
    block_bytes = Cp * HW * 4
    vmem_needed = (
        2 * 2 * block_bytes                      # x + out blocks, 2 buffers each
        + 2 * (3 * Cp) * (3 * Cp) * mm_bytes     # w1p + w2p, single-buffered
        + (3 * Cp) * HW * mm_bytes               # hcat scratch
        + 8 * Cp * HW * 4                        # f32 temporaries (t, rolls, h)
    )
    vmem_limit = int(min(max(int(vmem_needed * 1.5), 32 * 1024 * 1024),
                         100 * 1024 * 1024))

    const_spec = functools.partial(pl.BlockSpec,
                                   (3 * Cp, 3 * Cp), lambda b: (0, 0),
                                   pipeline_mode=pl.Buffered(1))

    # TODO: at production C*HW (v7x, 64 MiB VMEM) switch to an H-strip grid
    # axis with halo rows and a grid-reduction instance norm.
    out_flat = pl.pallas_call(
        functools.partial(resnet_block_kernel, H=H, W=W, C=Cp, eps=EPS),
        out_shape=jax.ShapeDtypeStruct((B, Cp, HW), jnp.float32),
        grid_spec=pltpu.PrefetchScalarGridSpec(
            num_scalar_prefetch=0,
            grid=(B,),
            in_specs=[
                pl.BlockSpec((1, Cp, HW), lambda b: (b, 0, 0)),
                const_spec(),
                const_spec(),
            ],
            out_specs=pl.BlockSpec((1, Cp, HW), lambda b: (b, 0, 0)),
            scratch_shapes=[pltpu.VMEM((3 * Cp, HW), matmul_dtype)],
        ),
        compiler_params=pltpu.CompilerParams(
            dimension_semantics=("parallel",),
            vmem_limit_bytes=vmem_limit),
    )(x_flat, w1p, w2p)
    return out_flat[:, :C].reshape(B, C, H, W)


def resnet_block_ref(x, w1, b1, w2, b2, matmul_dtype=jnp.float32):
    """Pure-JAX reference (NCHW, PyTorch OIHW weights, biases included).

    matmul_dtype lets the reference mirror the kernel's operand rounding so
    the bf16 path can be checked tightly; accumulation stays f32.
    """

    def conv_in(xx, w, b):
        xp = jnp.pad(xx, ((0, 0), (0, 0), (1, 1), (1, 1)), mode="reflect")
        y = lax.conv_general_dilated(
            xp.astype(matmul_dtype), w.astype(matmul_dtype), (1, 1), "VALID",
            dimension_numbers=("NCHW", "OIHW", "NCHW"),
            preferred_element_type=jnp.float32,
            precision=lax.Precision.HIGHEST)
        y = y + b.reshape(1, -1, 1, 1)
        mean = y.mean(axis=(2, 3), keepdims=True)
        var = ((y - mean) ** 2).mean(axis=(2, 3), keepdims=True)
        return (y - mean) * lax.rsqrt(var + EPS)

    h = jnp.maximum(conv_in(x, w1, b1), 0.0)
    return x + conv_in(h, w2, b2)


if __name__ == "__main__":
    B, C, H, W = 2, 4, 16, 16   # NCHW, ResnetBlock(dim=4), spatial 16x16

    key = jax.random.PRNGKey(0)
    kx, kw1, kb1, kw2, kb2 = jax.random.split(key, 5)
    x = jax.random.normal(kx, (B, C, H, W), jnp.float32)
    w1 = jax.random.normal(kw1, (C, C, 3, 3), jnp.float32) * 0.1
    b1 = jax.random.normal(kb1, (C,), jnp.float32) * 0.1
    w2 = jax.random.normal(kw2, (C, C, 3, 3), jnp.float32) * 0.1
    b2 = jax.random.normal(kb2, (C,), jnp.float32) * 0.1

    # Exact-structure check: f32 matmul operands vs. f32 reference.
    out_f32 = jax.block_until_ready(
        resnet_block_forward(x, w1, b1, w2, b2, matmul_dtype=jnp.float32))
    ref_f32 = jax.block_until_ready(resnet_block_ref(x, w1, b1, w2, b2))
    assert out_f32.shape == (B, C, H, W)
    err_f32 = float(jnp.max(jnp.abs(out_f32 - ref_f32)))
    assert jnp.allclose(out_f32, ref_f32, atol=1e-4, rtol=1e-4), err_f32

    # Default (bf16 MXU operands) path vs. a bf16-operand reference.
    out_bf16 = jax.block_until_ready(resnet_block_forward(x, w1, b1, w2, b2))
    ref_bf16 = jax.block_until_ready(
        resnet_block_ref(x, w1, b1, w2, b2, matmul_dtype=jnp.bfloat16))
    err_bf16 = float(jnp.max(jnp.abs(out_bf16 - ref_bf16)))
    assert jnp.allclose(out_bf16, ref_bf16, atol=2e-2, rtol=2e-2), err_bf16

    print("KERNEL_OK")
</pallas_src>

<mosaic_0001>
module attributes {stable_mosaic.version = 11 : i64} {
  func.func @resnet_block_kernel(%arg0: i32, %arg1: memref<1x8x256xf32, #tpu.memory_space<vmem>>, %arg2: memref<24x24xf32, #tpu.memory_space<vmem>>, %arg3: memref<24x24xf32, #tpu.memory_space<vmem>>, %arg4: memref<1x8x256xf32, #tpu.memory_space<vmem>>, %arg5: memref<24x256xf32, #tpu.memory_space<vmem>>) attributes {dimension_semantics = [#tpu.dimension_semantics<parallel>], iteration_bounds = array<i64: 2>, scalar_prefetch = 0 : i64, scratch_operands = 1 : i64, tpu.core_type = #tpu.core_type<tc>, window_params = [{transform_indices = @transform_0, window_bounds = array<i64: 1, 8, 256>}, {pipeline_mode = #tpu.pipeline_mode<synchronous>, transform_indices = @transform_1, window_bounds = array<i64: 24, 24>}, {pipeline_mode = #tpu.pipeline_mode<synchronous>, transform_indices = @transform_2, window_bounds = array<i64: 24, 24>}, {transform_indices = @transform_3, window_bounds = array<i64: 1, 8, 256>}]} {
    %c0 = arith.constant 0 : index
    %c0_0 = arith.constant 0 : index
    %c0_1 = arith.constant 0 : index
    %0 = vector.load %arg1[%c0, %c0_0, %c0_1] : memref<1x8x256xf32, #tpu.memory_space<vmem>>, vector<1x8x256xf32>
    %1 = vector.shape_cast %0 : vector<1x8x256xf32> to vector<8x256xf32>
    %2 = tpu.iota {dimensions = array<i32: 1>} : vector<1x256xi32>
    %c15_i32 = arith.constant 15 : i32
    %3 = vector.broadcast %c15_i32 : i32 to vector<1x256xi32>
    %4 = arith.andi %2, %3 : vector<1x256xi32>
    %c0_i32 = arith.constant 0 : i32
    %5 = vector.broadcast %c0_i32 : i32 to vector<1x256xi32>
    %6 = arith.cmpi eq, %4, %5 : vector<1x256xi32>
    %c15_i32_2 = arith.constant 15 : i32
    %7 = vector.broadcast %c15_i32_2 : i32 to vector<1x256xi32>
    %8 = arith.cmpi eq, %4, %7 : vector<1x256xi32>
    %c16_i32 = arith.constant 16 : i32
    %9 = vector.broadcast %c16_i32 : i32 to vector<1x256xi32>
    %10 = arith.cmpi slt, %2, %9 : vector<1x256xi32>
    %c240_i32 = arith.constant 240 : i32
    %11 = vector.broadcast %c240_i32 : i32 to vector<1x256xi32>
    %12 = arith.cmpi sge, %2, %11 : vector<1x256xi32>
    %c255_i32 = arith.constant 255 : i32
    %13 = tpu.dynamic_rotate %1 by %c255_i32 dim 1 : vector<8x256xf32>, i32 -> vector<8x256xf32>
    %c1_i32 = arith.constant 1 : i32
    %14 = tpu.dynamic_rotate %1 by %c1_i32 dim 1 : vector<8x256xf32>, i32 -> vector<8x256xf32>
    %15 = vector.shape_cast %6 : vector<1x256xi1> to vector<1x256xi1>
    %16 = vector.broadcast %15 : vector<1x256xi1> to vector<8x256xi1>
    %17 = arith.select %16, %13, %14 : vector<8x256xi1>, vector<8x256xf32>
    %c0_3 = arith.constant 0 : index
    %c0_4 = arith.constant 0 : index
    %18 = vector.load %arg5[%c0_3, %c0_4] : memref<24x256xf32, #tpu.memory_space<vmem>>, vector<8x256xf32>
    tpu.vector_store %arg5[%c0_3, %c0_4], %17 {strides = array<i32>} : memref<24x256xf32, #tpu.memory_space<vmem>>, vector<8x256xf32>,
    %c8 = arith.constant 8 : index
    %c0_5 = arith.constant 0 : index
    %19 = vector.load %arg5[%c8, %c0_5] : memref<24x256xf32, #tpu.memory_space<vmem>>, vector<8x256xf32>
    tpu.vector_store %arg5[%c8, %c0_5], %1 {strides = array<i32>} : memref<24x256xf32, #tpu.memory_space<vmem>>, vector<8x256xf32>,
    %20 = vector.shape_cast %8 : vector<1x256xi1> to vector<1x256xi1>
    %21 = vector.broadcast %20 : vector<1x256xi1> to vector<8x256xi1>
    %22 = arith.select %21, %14, %13 : vector<8x256xi1>, vector<8x256xf32>
    %c16 = arith.constant 16 : index
    %c0_6 = arith.constant 0 : index
    %23 = vector.load %arg5[%c16, %c0_6] : memref<24x256xf32, #tpu.memory_space<vmem>>, vector<8x256xf32>
    tpu.vector_store %arg5[%c16, %c0_6], %22 {strides = array<i32>} : memref<24x256xf32, #tpu.memory_space<vmem>>, vector<8x256xf32>,
    %c0_7 = arith.constant 0 : index
    %c0_8 = arith.constant 0 : index
    %24 = vector.load %arg2[%c0_7, %c0_8] : memref<24x24xf32, #tpu.memory_space<vmem>>, vector<24x24xf32>
    %c0_9 = arith.constant 0 : index
    %c0_10 = arith.constant 0 : index
    %25 = vector.load %arg5[%c0_9, %c0_10] : memref<24x256xf32, #tpu.memory_space<vmem>>, vector<24x256xf32>
    %cst = arith.constant dense<0.000000e+00> : vector<24x256xf32>
    %26 = tpu.matmul %24, %25, %cst {dimension_numbers = #tpu.dot_dimension_numbers<[1], [0], [0], [1], [0, 0, 1, 1], [], []>} : vector<24x24xf32>, vector<24x256xf32>, vector<24x256xf32> -> vector<24x256xf32>
    %27 = vector.extract_strided_slice %26 {offsets = [0, 0], sizes = [8, 256], strides = [1, 1]} : vector<24x256xf32> to vector<8x256xf32>
    %28 = vector.extract_strided_slice %26 {offsets = [8, 0], sizes = [8, 256], strides = [1, 1]} : vector<24x256xf32> to vector<8x256xf32>
    %29 = vector.extract_strided_slice %26 {offsets = [16, 0], sizes = [8, 256], strides = [1, 1]} : vector<24x256xf32> to vector<8x256xf32>
    %c240_i32_11 = arith.constant 240 : i32
    %30 = tpu.dynamic_rotate %27 by %c240_i32_11 dim 1 : vector<8x256xf32>, i32 -> vector<8x256xf32>
    %c16_i32_12 = arith.constant 16 : i32
    %31 = tpu.dynamic_rotate %27 by %c16_i32_12 dim 1 : vector<8x256xf32>, i32 -> vector<8x256xf32>
    %32 = vector.shape_cast %10 : vector<1x256xi1> to vector<1x256xi1>
    %33 = vector.broadcast %32 : vector<1x256xi1> to vector<8x256xi1>
    %34 = arith.select %33, %30, %31 : vector<8x256xi1>, vector<8x256xf32>
    %35 = arith.addf %28, %34 : vector<8x256xf32>
    %c16_i32_13 = arith.constant 16 : i32
    %36 = tpu.dynamic_rotate %29 by %c16_i32_13 dim 1 : vector<8x256xf32>, i32 -> vector<8x256xf32>
    %c240_i32_14 = arith.constant 240 : i32
    %37 = tpu.dynamic_rotate %29 by %c240_i32_14 dim 1 : vector<8x256xf32>, i32 -> vector<8x256xf32>
    %38 = vector.shape_cast %12 : vector<1x256xi1> to vector<1x256xi1>
    %39 = vector.broadcast %38 : vector<1x256xi1> to vector<8x256xi1>
    %40 = arith.select %39, %36, %37 : vector<8x256xi1>, vector<8x256xf32>
    %41 = arith.addf %35, %40 : vector<8x256xf32>
    %cst_15 = arith.constant dense<0.000000e+00> : vector<8xf32>
    %42 = vector.multi_reduction <add>, %41, %cst_15 [1] : vector<8x256xf32> to vector<8xf32>
    %43 = vector.shape_cast %42 : vector<8xf32> to vector<8x1xf32>
    %cst_16 = arith.constant 2.560000e+02 : f32
    %44 = vector.broadcast %cst_16 : f32 to vector<8x1xf32>
    %45 = arith.divf %43, %44 : vector<8x1xf32>
    %46 = arith.mulf %41, %41 : vector<8x256xf32>
    %cst_17 = arith.constant dense<0.000000e+00> : vector<8xf32>
    %47 = vector.multi_reduction <add>, %46, %cst_17 [1] : vector<8x256xf32> to vector<8xf32>
    %48 = vector.shape_cast %47 : vector<8xf32> to vector<8x1xf32>
    %cst_18 = arith.constant 2.560000e+02 : f32
    %49 = vector.broadcast %cst_18 : f32 to vector<8x1xf32>
    %50 = arith.divf %48, %49 : vector<8x1xf32>
    %51 = arith.mulf %45, %45 : vector<8x1xf32>
    %52 = arith.subf %50, %51 : vector<8x1xf32>
    %cst_19 = arith.constant 0.000000e+00 : f32
    %53 = vector.broadcast %cst_19 : f32 to vector<8x1xf32>
    %54 = arith.maximumf %52, %53 : vector<8x1xf32>
    %55 = vector.broadcast %45 : vector<8x1xf32> to vector<8x256xf32>
    %56 = arith.subf %41, %55 : vector<8x256xf32>
    %cst_20 = arith.constant 9.99999974E-6 : f32
    %57 = vector.broadcast %cst_20 : f32 to vector<8x1xf32>
    %58 = arith.addf %54, %57 : vector<8x1xf32>
    %59 = math.rsqrt %58 : vector<8x1xf32>
    %60 = vector.broadcast %59 : vector<8x1xf32> to vector<8x256xf32>
    %61 = arith.mulf %56, %60 : vector<8x256xf32>
    %cst_21 = arith.constant 0.000000e+00 : f32
    %62 = vector.broadcast %cst_21 : f32 to vector<8x256xf32>
    %63 = arith.maximumf %61, %62 : vector<8x256xf32>
    %c255_i32_22 = arith.constant 255 : i32
    %64 = tpu.dynamic_rotate %63 by %c255_i32_22 dim 1 : vector<8x256xf32>, i32 -> vector<8x256xf32>
    %c1_i32_23 = arith.constant 1 : i32
    %65 = tpu.dynamic_rotate %63 by %c1_i32_23 dim 1 : vector<8x256xf32>, i32 -> vector<8x256xf32>
    %66 = vector.shape_cast %6 : vector<1x256xi1> to vector<1x256xi1>
    %67 = vector.broadcast %66 : vector<1x256xi1> to vector<8x256xi1>
    %68 = arith.select %67, %64, %65 : vector<8x256xi1>, vector<8x256xf32>
    %c0_24 = arith.constant 0 : index
    %c0_25 = arith.constant 0 : index
    %69 = vector.load %arg5[%c0_24, %c0_25] : memref<24x256xf32, #tpu.memory_space<vmem>>, vector<8x256xf32>
    tpu.vector_store %arg5[%c0_24, %c0_25], %68 {strides = array<i32>} : memref<24x256xf32, #tpu.memory_space<vmem>>, vector<8x256xf32>,
    %c8_26 = arith.constant 8 : index
    %c0_27 = arith.constant 0 : index
    %70 = vector.load %arg5[%c8_26, %c0_27] : memref<24x256xf32, #tpu.memory_space<vmem>>, vector<8x256xf32>
    tpu.vector_store %arg5[%c8_26, %c0_27], %63 {strides = array<i32>} : memref<24x256xf32, #tpu.memory_space<vmem>>, vector<8x256xf32>,
    %71 = vector.shape_cast %8 : vector<1x256xi1> to vector<1x256xi1>
    %72 = vector.broadcast %71 : vector<1x256xi1> to vector<8x256xi1>
    %73 = arith.select %72, %65, %64 : vector<8x256xi1>, vector<8x256xf32>
    %c16_28 = arith.constant 16 : index
    %c0_29 = arith.constant 0 : index
    %74 = vector.load %arg5[%c16_28, %c0_29] : memref<24x256xf32, #tpu.memory_space<vmem>>, vector<8x256xf32>
    tpu.vector_store %arg5[%c16_28, %c0_29], %73 {strides = array<i32>} : memref<24x256xf32, #tpu.memory_space<vmem>>, vector<8x256xf32>,
    %c0_30 = arith.constant 0 : index
    %c0_31 = arith.constant 0 : index
    %75 = vector.load %arg3[%c0_30, %c0_31] : memref<24x24xf32, #tpu.memory_space<vmem>>, vector<24x24xf32>
    %c0_32 = arith.constant 0 : index
    %c0_33 = arith.constant 0 : index
    %76 = vector.load %arg5[%c0_32, %c0_33] : memref<24x256xf32, #tpu.memory_space<vmem>>, vector<24x256xf32>
    %cst_34 = arith.constant dense<0.000000e+00> : vector<24x256xf32>
    %77 = tpu.matmul %75, %76, %cst_34 {dimension_numbers = #tpu.dot_dimension_numbers<[1], [0], [0], [1], [0, 0, 1, 1], [], []>} : vector<24x24xf32>, vector<24x256xf32>, vector<24x256xf32> -> vector<24x256xf32>
    %78 = vector.extract_strided_slice %77 {offsets = [0, 0], sizes = [8, 256], strides = [1, 1]} : vector<24x256xf32> to vector<8x256xf32>
    %79 = vector.extract_strided_slice %77 {offsets = [8, 0], sizes = [8, 256], strides = [1, 1]} : vector<24x256xf32> to vector<8x256xf32>
    %80 = vector.extract_strided_slice %77 {offsets = [16, 0], sizes = [8, 256], strides = [1, 1]} : vector<24x256xf32> to vector<8x256xf32>
    %c240_i32_35 = arith.constant 240 : i32
    %81 = tpu.dynamic_rotate %78 by %c240_i32_35 dim 1 : vector<8x256xf32>, i32 -> vector<8x256xf32>
    %c16_i32_36 = arith.constant 16 : i32
    %82 = tpu.dynamic_rotate %78 by %c16_i32_36 dim 1 : vector<8x256xf32>, i32 -> vector<8x256xf32>
    %83 = vector.shape_cast %10 : vector<1x256xi1> to vector<1x256xi1>
    %84 = vector.broadcast %83 : vector<1x256xi1> to vector<8x256xi1>
    %85 = arith.select %84, %81, %82 : vector<8x256xi1>, vector<8x256xf32>
    %86 = arith.addf %79, %85 : vector<8x256xf32>
    %c16_i32_37 = arith.constant 16 : i32
    %87 = tpu.dynamic_rotate %80 by %c16_i32_37 dim 1 : vector<8x256xf32>, i32 -> vector<8x256xf32>
    %c240_i32_38 = arith.constant 240 : i32
    %88 = tpu.dynamic_rotate %80 by %c240_i32_38 dim 1 : vector<8x256xf32>, i32 -> vector<8x256xf32>
    %89 = vector.shape_cast %12 : vector<1x256xi1> to vector<1x256xi1>
    %90 = vector.broadcast %89 : vector<1x256xi1> to vector<8x256xi1>
    %91 = arith.select %90, %87, %88 : vector<8x256xi1>, vector<8x256xf32>
    %92 = arith.addf %86, %91 : vector<8x256xf32>
    %cst_39 = arith.constant dense<0.000000e+00> : vector<8xf32>
    %93 = vector.multi_reduction <add>, %92, %cst_39 [1] : vector<8x256xf32> to vector<8xf32>
    %94 = vector.shape_cast %93 : vector<8xf32> to vector<8x1xf32>
    %cst_40 = arith.constant 2.560000e+02 : f32
    %95 = vector.broadcast %cst_40 : f32 to vector<8x1xf32>
    %96 = arith.divf %94, %95 : vector<8x1xf32>
    %97 = arith.mulf %92, %92 : vector<8x256xf32>
    %cst_41 = arith.constant dense<0.000000e+00> : vector<8xf32>
    %98 = vector.multi_reduction <add>, %97, %cst_41 [1] : vector<8x256xf32> to vector<8xf32>
    %99 = vector.shape_cast %98 : vector<8xf32> to vector<8x1xf32>
    %cst_42 = arith.constant 2.560000e+02 : f32
    %100 = vector.broadcast %cst_42 : f32 to vector<8x1xf32>
    %101 = arith.divf %99, %100 : vector<8x1xf32>
    %102 = arith.mulf %96, %96 : vector<8x1xf32>
    %103 = arith.subf %101, %102 : vector<8x1xf32>
    %cst_43 = arith.constant 0.000000e+00 : f32
    %104 = vector.broadcast %cst_43 : f32 to vector<8x1xf32>
    %105 = arith.maximumf %103, %104 : vector<8x1xf32>
    %106 = vector.broadcast %96 : vector<8x1xf32> to vector<8x256xf32>
    %107 = arith.subf %92, %106 : vector<8x256xf32>
    %cst_44 = arith.constant 9.99999974E-6 : f32
    %108 = vector.broadcast %cst_44 : f32 to vector<8x1xf32>
    %109 = arith.addf %105, %108 : vector<8x1xf32>
    %110 = math.rsqrt %109 : vector<8x1xf32>
    %111 = vector.broadcast %110 : vector<8x1xf32> to vector<8x256xf32>
    %112 = arith.mulf %107, %111 : vector<8x256xf32>
    %113 = arith.addf %1, %112 : vector<8x256xf32>
    %c0_45 = arith.constant 0 : index
    %c0_46 = arith.constant 0 : index
    %c0_47 = arith.constant 0 : index
    %114 = vector.load %arg4[%c0_45, %c0_46, %c0_47] : memref<1x8x256xf32, #tpu.memory_space<vmem>>, vector<1x8x256xf32>
    %115 = vector.shape_cast %114 : vector<1x8x256xf32> to vector<8x256xf32>
    %116 = vector.shape_cast %113 : vector<8x256xf32> to vector<1x8x256xf32>
    tpu.vector_store %arg4[%c0_45, %c0_46, %c0_47], %116 {strides = array<i32>} : memref<1x8x256xf32, #tpu.memory_space<vmem>>, vector<1x8x256xf32>,
    return
  }
  func.func @transform_0(%arg0: i32) -> (i32, i32, i32) {
    %c0_i32 = arith.constant 0 : i32
    %c0_i32_0 = arith.constant 0 : i32
    %c0_i32_1 = arith.constant 0 : i32
    return %arg0, %c0_i32, %c0_i32_0 : i32, i32, i32
  }
  func.func @transform_1(%arg0: i32) -> (i32, i32) {
    %c0_i32 = arith.constant 0 : i32
    %c0_i32_0 = arith.constant 0 : i32
    %c0_i32_1 = arith.constant 0 : i32
    return %c0_i32, %c0_i32_0 : i32, i32
  }
  func.func @transform_2(%arg0: i32) -> (i32, i32) {
    %c0_i32 = arith.constant 0 : i32
    %c0_i32_0 = arith.constant 0 : i32
    %c0_i32_1 = arith.constant 0 : i32
    return %c0_i32, %c0_i32_0 : i32, i32
  }
  func.func @transform_3(%arg0: i32) -> (i32, i32, i32) {
    %c0_i32 = arith.constant 0 : i32
    %c0_i32_0 = arith.constant 0 : i32
    %c0_i32_1 = arith.constant 0 : i32
    return %arg0, %c0_i32, %c0_i32_0 : i32, i32, i32
  }
}

</mosaic_0001>

<llo_original>
// kernel: tpu_custom_call.1
$region0: #{tpu_custom_call.1}
  #allocation0 [shape = 'u32[]', space=smem, size = 0x4, offset = 0x4, fixed_abs, tag = 'smem constant byte address 0x4 - core index']
  #allocation1 [shape = 'u32[72,128]{1,0:T(1,128)}', space=vmem, size = 0x9000, scoped, tag = 'internal scratch']
  #allocation2 [shape = 'f32[24,256]{1,0:T(8,128)}', space=vmem, size = 0x6000, scoped, tag = 'scratch operand']
  %s0 = inlined_call_operand.hbm [shape: f32[2,8,256], index: 0, kind: input, shape index: {}]
  %s1 = inlined_call_operand.hbm [shape: f32[24,24], index: 1, kind: input, shape index: {}]
  %s2 = inlined_call_operand.hbm [shape: f32[24,24], index: 2, kind: input, shape index: {}]
  %s3 = inlined_call_operand.hbm [shape: f32[2,8,256], index: 3, kind: output, shape index: {}]
  %s4 = sld [smem:[#allocation0]]
  $region57: #{tpu_custom_call.1} parent=0
    _
  %s6 = ssub.s32 1, %s4
  %s7 = scalar_select 0, %s6, %s4
  $region1: #{tpu_custom_call.1} parent=0
    #allocation3 [shape = 'u8[16384]{0}', space=vmem, size = 0x4000, scoped, tag = 'input window, operand 0']
    #allocation4 [shape = 's32[2]{0}', space=sflag, size = 0x8, scoped, tag = 'scoped memory for tpu_custom_call.1']
    #allocation5 [shape = 's32[2]{0}', space=sflag, size = 0x8, scoped, tag = 'scoped memory for tpu_custom_call.1']
    #allocation6 [shape = 'u8[12288]{0}', space=vmem, size = 0x3000, scoped, tag = 'input window, operand 1, single buffered']
    #allocation7 [shape = 's32[1]{0}', space=sflag, size = 0x4, scoped, tag = 'scoped memory for tpu_custom_call.1']
    #allocation8 [shape = 'u8[12288]{0}', space=vmem, size = 0x3000, scoped, tag = 'input window, operand 2, single buffered']
    #allocation9 [shape = 'u8[16384]{0}', space=vmem, size = 0x4000, scoped, tag = 'output window, operand 0']
    %8 = vsyncpa [#allocation4], 0
    %s9 = scalar_lea.sflag [#allocation4], 1
    %10 = vsyncpa %s9, 0
    %11 = vsyncpa [#allocation7], 0
    %12 = vsyncpa [#allocation5], 0
    %s13 = scalar_lea.sflag [#allocation5], 1
    %14 = vsyncpa %s13, 0
    loop: start=0, step=1, limit=4
    $region2: #{tpu_custom_call.1} parent=1 // loop_pre_header
      _
    $region3: #{tpu_custom_call.1} parent=1 // loop_header
      %s16 = sphi 0, %s20
      %p17 = scmp.ge.s32.totalorder %s16, 4
      %s26 = sphi 0, %s28
      %s29 = sphi 0, %s26
      %s30 = sphi 0, %s29
      %s46 = sphi 0, %s30
      %s50 = sphi 0, %s50
      %s52 = sphi 0, %s50
      %s53 = sphi 0, %s52
      %s67 = sphi 0, %s53
      %s71 = sphi 0, %s71
      %s73 = sphi 0, %s71
      %s74 = sphi 0, %s73
      %s88 = sphi 0, %s74
      %s94 = sphi 0, %s96
      %s97 = sphi 0, %s94
      %s98 = sphi 0, %s97
      %s114 = sphi 0, %s98
    $region4: #{tpu_custom_call.1} parent=1 // loop_header_branch
      %19 = sbr.rel (%p17) target = $region8
    $region5: #{tpu_custom_call.1} parent=1 // loop_body
      %s21 = ssub.s32 %s16, 1
      %s22 = ssub.s32 %s16, 2
      %s23 = sadd.s32 %s16, 1
      %s24 = ssub.s32 %s16, %s23
      %p25 = scmp.eq.s32.totalorder %s24, 0
      %s27 = sadd.s32 %s26, 1
      %s28 = scalar_select %p25, %s26, %s27
      %p31 = pneg %p25
      %p32 = scmp.eq.s32.totalorder %s16, 1
      %p33 = por %p31, %p32
      %p34 = scmp.ne.s32.totalorder %s26, %s29
      %p35 = scmp.eq.s32.totalorder %s16, 0
      %p36 = por %p34, %p35
      %p37 = scmp.ne.s32.totalorder %s26, %s29
      %p38 = scmp.eq.s32.totalorder %s21, 1
      %p39 = por %p37, %p38
      %p40 = scmp.ne.s32.totalorder %s29, %s30
      %p41 = scmp.eq.s32.totalorder %s21, 0
      %p42 = por %p40, %p41
      %p43 = scmp.ne.s32.totalorder %s29, %s30
      %p44 = scmp.eq.s32.totalorder %s22, 1
      %p45 = por %p43, %p44
      %p47 = scmp.ne.s32.totalorder %s30, %s46
      %p48 = scmp.eq.s32.totalorder %s22, 0
      %p49 = por %p47, %p48
      %s51 = sadd.s32 %s50, 1
      %p54 = scmp.eq.s32.totalorder %s16, 1
      %p55 = scmp.ne.s32.totalorder %s50, %s52
      %p56 = scmp.eq.s32.totalorder %s16, 0
      %p57 = por %p55, %p56
      %p58 = scmp.ne.s32.totalorder %s50, %s52
      %p59 = scmp.eq.s32.totalorder %s21, 1
      %p60 = por %p58, %p59
      %p61 = scmp.ne.s32.totalorder %s52, %s53
      %p62 = scmp.eq.s32.totalorder %s21, 0
      %p63 = por %p61, %p62
      %p64 = scmp.ne.s32.totalorder %s52, %s53
      %p65 = scmp.eq.s32.totalorder %s22, 1
      %p66 = por %p64, %p65
      %p68 = scmp.ne.s32.totalorder %s53, %s67
      %p69 = scmp.eq.s32.totalorder %s22, 0
      %p70 = por %p68, %p69
      %s72 = sadd.s32 %s71, 1
      %p75 = scmp.eq.s32.totalorder %s16, 1
      %p76 = scmp.ne.s32.totalorder %s71, %s73
      %p77 = scmp.eq.s32.totalorder %s16, 0
      %p78 = por %p76, %p77
      %p79 = scmp.ne.s32.totalorder %s71, %s73
      %p80 = scmp.eq.s32.totalorder %s21, 1
      %p81 = por %p79, %p80
      %p82 = scmp.ne.s32.totalorder %s73, %s74
      %p83 = scmp.eq.s32.totalorder %s21, 0
      %p84 = por %p82, %p83
      %p85 = scmp.ne.s32.totalorder %s73, %s74
      %p86 = scmp.eq.s32.totalorder %s22, 1
      %p87 = por %p85, %p86
      %p89 = scmp.ne.s32.totalorder %s74, %s88
      %p90 = scmp.eq.s32.totalorder %s22, 0
      %p91 = por %p89, %p90
      %s92 = ssub.s32 %s16, %s23
      %p93 = scmp.eq.s32.totalorder %s92, 0
      %s95 = sadd.s32 %s94, 1
      %s96 = scalar_select %p93, %s94, %s95
      %p99 = pneg %p93
      %p100 = scmp.eq.s32.totalorder %s16, 1
      %p101 = por %p99, %p100
      %p102 = scmp.ne.s32.totalorder %s94, %s97
      %p103 = scmp.eq.s32.totalorder %s16, 0
      %p104 = por %p102, %p103
      %p105 = scmp.ne.s32.totalorder %s94, %s97
      %p106 = scmp.eq.s32.totalorder %s21, 1
      %p107 = por %p105, %p106
      %p108 = scmp.ne.s32.totalorder %s97, %s98
      %p109 = scmp.eq.s32.totalorder %s21, 0
      %p110 = por %p108, %p109
      %p111 = scmp.ne.s32.totalorder %s97, %s98
      %p112 = scmp.eq.s32.totalorder %s22, 1
      %p113 = por %p111, %p112
      %p115 = scmp.ne.s32.totalorder %s98, %s114
      %p116 = scmp.eq.s32.totalorder %s22, 0
      %p117 = por %p115, %p116
      %p118 = scmp.le.s32.totalorder 1, %s16
      %p119 = scmp.lt.s32.totalorder %s16, 3
      %p120 = pnand %p118, %p119
      %p121 = pneg %p120
      // Predicated region
      $region9: #{tpu_custom_call.1} parent=5 // pred_check
        _
      $region10: #{tpu_custom_call.1} parent=5 // pred_check_branch
        %123 = sbr.rel (%p120) target = $region12
      $region11: #{tpu_custom_call.1} parent=5 // pred_region
        %s124 = ssub.s32 %s16, 1
        // Predicated region
        $region13: #{tpu_custom_call.1} parent=11 // pred_check
          %p125 = pneg %p63
        $region14: #{tpu_custom_call.1} parent=11 // pred_check_branch
          %127 = sbr.rel (%p125) target = $region16
        $region15: #{tpu_custom_call.1} parent=11 // pred_region
          %129 = vsyncadd [#allocation7], 0
          %s130 = sshll.u32 %s1, 4
          %s131 = int_to_ptr.hbm [resolvable:$true] %s130
          %s132 = sshll.u32 [#allocation6], 4
          %s133 = int_to_ptr.vmem [resolvable:$true] %s132
          %138 = dma.hbm_to_vmem [thread:$0]  %s131, 384, %s133, [#allocation7], 128, 128, 8
        $region16: #{tpu_custom_call.1} parent=11 // pred_fallthru
          _
        // Predicated region
        $region17: #{tpu_custom_call.1} parent=11 // pred_check
          %p139 = pneg %p84
        $region18: #{tpu_custom_call.1} parent=11 // pred_check_branch
          %141 = sbr.rel (%p139) target = $region20
        $region19: #{tpu_custom_call.1} parent=11 // pred_region
          %143 = vsyncadd [#allocation7], 0
          %s144 = sshll.u32 %s2, 4
          %s145 = int_to_ptr.hbm [resolvable:$true] %s144
          %s146 = sshll.u32 [#allocation8], 4
          %s147 = int_to_ptr.vmem [resolvable:$true] %s146
          %152 = dma.hbm_to_vmem [thread:$0]  %s145, 384, %s147, [#allocation7], 128, 128, 8
        $region20: #{tpu_custom_call.1} parent=11 // pred_fallthru
          _
      $region12: #{tpu_custom_call.1} parent=5 // pred_fallthru
        _
      %p153 = scmp.lt.s32.totalorder %s16, 2
      // Predicated region
      $region21: #{tpu_custom_call.1} parent=5 // pred_check
        %p154 = pneg %p153
      $region22: #{tpu_custom_call.1} parent=5 // pred_check_branch
        %156 = sbr.rel (%p154) target = $region24
      $region23: #{tpu_custom_call.1} parent=5 // pred_region
        // Predicated region
        $region25: #{tpu_custom_call.1} parent=23 // pred_check
          %p157 = pneg %p36
        $region26: #{tpu_custom_call.1} parent=23 // pred_check_branch
          %159 = sbr.rel (%p157) target = $region28
        $region27: #{tpu_custom_call.1} parent=23 // pred_region
          %s160 = sand.u32 %s26, 1
          %s161 = scalar_lea.sflag [#allocation4], %s160
          %s162 = sand.u32 %s26, 1
          %s163 = smul.addr %s162, 16
          %s164 = scalar_lea.vmem [#allocation3], %s163
          %166 = vsyncadd %s161, 0
          %s167 = smul.addr %s16, 2
          %s168 = smul.addr %s167, 8
          %s169 = scalar_lea.hbm %s0, %s168
          %s171 = sshll.u32 %s169, 4
          %s172 = int_to_ptr.hbm [resolvable:$true] %s171
          %s173 = sshll.u32 %s164, 4
          %s174 = int_to_ptr.vmem [resolvable:$true] %s173
          %176 = dma.hbm_to_vmem [thread:$0]  %s172, 256, %s174, %s161
        $region28: #{tpu_custom_call.1} parent=23 // pred_fallthru
          _
      $region24: #{tpu_custom_call.1} parent=5 // pred_fallthru
        _
      %p177 = scmp.le.s32.totalorder 1, %s16
      %p178 = scmp.lt.s32.totalorder %s16, 3
      %p179 = pnand %p177, %p178
      %p180 = pneg %p179
      // Predicated region
      $region29: #{tpu_custom_call.1} parent=5 // pred_check
        _
      $region30: #{tpu_custom_call.1} parent=5 // pred_check_branch
        %182 = sbr.rel (%p179) target = $region32
      $region31: #{tpu_custom_call.1} parent=5 // pred_region
        %s183 = ssub.s32 %s16, 1
        %s184 = sand.u32 %s29, 1
        %s185 = scalar_lea.sflag [#allocation4], %s184
        %s186 = sand.u32 %s29, 1
        %s187 = smul.addr %s186, 16
        %s188 = scalar_lea.vmem [#allocation3], %s187
        // Predicated region
        $region33: #{tpu_custom_call.1} parent=31 // pred_check
          %p189 = pneg %p42
        $region34: #{tpu_custom_call.1} parent=31 // pred_check_branch
          %191 = sbr.rel (%p189) target = $region36
        $region35: #{tpu_custom_call.1} parent=31 // pred_region
          %193 = dma.done %s185, 256
        $region36: #{tpu_custom_call.1} parent=31 // pred_fallthru
          _
        // Predicated region
        $region37: #{tpu_custom_call.1} parent=31 // pred_check
          %p194 = pneg %p63
        $region38: #{tpu_custom_call.1} parent=31 // pred_check_branch
          %196 = sbr.rel (%p194) target = $region40
        $region39: #{tpu_custom_call.1} parent=31 // pred_region
          %198 = dma.done [#allocation7], 384
        $region40: #{tpu_custom_call.1} parent=31 // pred_fallthru
          _
        // Predicated region
        $region41: #{tpu_custom_call.1} parent=31 // pred_check
          %p199 = pneg %p84
        $region42: #{tpu_custom_call.1} parent=31 // pred_check_branch
          %201 = sbr.rel (%p199) target = $region44
        $region43: #{tpu_custom_call.1} parent=31 // pred_region
          %203 = dma.done [#allocation7], 384
        $region44: #{tpu_custom_call.1} parent=31 // pred_fallthru
          _
        %s204 = sand.u32 %s29, 1
        %s205 = scalar_lea.sflag [#allocation4], %s204
        %s206 = sand.u32 %s29, 1
        %s207 = smul.addr %s206, 16
        %s208 = scalar_lea.vmem [#allocation3], %s207
        %p209 = pneg %p42
        %p210 = pneg %p39
        %p211 = pneg %p63
        %p212 = pneg %p60
        %p213 = pneg %p84
        %p214 = pneg %p81
        %p215 = pneg %p110
        %p216 = pneg %p107
        %s217 = sand.u32 %s97, 1
        %s218 = scalar_lea.sflag [#allocation5], %s217
        %s219 = sand.u32 %s97, 1
        %s220 = smul.addr %s219, 16
        %s221 = scalar_lea.vmem [#allocation9], %s220
        %v222 = vld [vmem:[%s188] sm:$0xff]
        %v223 = vld [vmem:[%s188 + $0x8] sm:$0xff]
        %v224 = vlaneseq
        %v225 = vand.u32 %v224, 127
        %v226 = vadd.s32 %v225, 128
        %v227 = vand.u32 %v225, 15
        %v228 = vand.u32 %v226, 15
        %vm229 = vcmp.eq.s32.totalorder %v227, 0
        %vm230 = vcmp.eq.s32.totalorder %v228, 0
        %vm231 = vcmp.eq.s32.totalorder %v227, 15
        %vm232 = vcmp.eq.s32.totalorder %v228, 15
        %vm233 = vcmp.lt.s32.totalorder %v225, 16
        %vm234 = vcmp.lt.s32.totalorder %v226, 16
        %vm235 = vcmp.ge.s32.totalorder %v225, 240
        %vm236 = vcmp.ge.s32.totalorder %v226, 240
        %237 = vrot.lane.b32.xlu0 %v222, 127
        %v238 = vpop.permute.xlu0 %237
        %239 = vrot.lane.b32.xlu0 %v223, 127
        %v240 = vpop.permute.xlu0 %239
        %vm241 = vcmp.lt.s32.totalorder %v225, 127
        %v242 = vsel %vm241, %v238, %v240
        %v243 = vsel %vm241, %v240, %v238
        %244 = vrot.lane.b32.xlu0 %v222, 1
        %v245 = vpop.permute.xlu0 %244
        %246 = vrot.lane.b32.xlu0 %v223, 1
        %v247 = vpop.permute.xlu0 %246
        %vm248 = vcmp.lt.s32.totalorder %v225, 1
        %v249 = vsel %vm248, %v245, %v247
        %v250 = vsel %vm248, %v247, %v245
        %v251 = vsel %vm229, 1, 0
        %v252 = vsel %vm230, 1, 0
        %vm253 = vcmp.eq.s32.totalorder %v251, 1
        %vm254 = vcmp.eq.s32.totalorder %v252, 1
        %v255 = vsel %vm253, %v242, %v250
        %v256 = vsel %vm254, %v243, %v249
        %257 = vst [vmem:[#allocation2] sm:$0xff] %v255
        %258 = vst [vmem:[#allocation2 + $0x8] sm:$0xff] %v256
        %259 = vst [vmem:[#allocation2 + $0x10] sm:$0xff] %v222
        %260 = vst [vmem:[#allocation2 + $0x18] sm:$0xff] %v223
        %v261 = vsel %vm231, 1, 0
        %v262 = vsel %vm232, 1, 0
        %vm263 = vcmp.eq.s32.totalorder %v261, 1
        %vm264 = vcmp.eq.s32.totalorder %v262, 1
        %v265 = vsel %vm263, %v250, %v242
        %v266 = vsel %vm264, %v249, %v243
        %267 = vst [vmem:[#allocation2 + $0x20] sm:$0xff] %v265
        %268 = vst [vmem:[#allocation2 + $0x28] sm:$0xff] %v266
        %v269 = vld [vmem:[#allocation6] sm:$0xff]
        %v270 = vld [vmem:[#allocation6 + $0x8] sm:$0xff]
        %v271 = vld [vmem:[#allocation6 + $0x10] sm:$0xff]
        %v272 = vld [vmem:[#allocation2] sm:$0xff]
        %v273 = vld [vmem:[#allocation2 + $0x8] sm:$0xff]
        %v274 = vld [vmem:[#allocation2 + $0x10] sm:$0xff]
        %v275 = vld [vmem:[#allocation2 + $0x18] sm:$0xff]
        %v276 = vld [vmem:[#allocation2 + $0x20] sm:$0xff]
        %v277 = vld [vmem:[#allocation2 + $0x28] sm:$0xff]
        %vm278 = vcmask 195584
        %v280 = vsel %vm278, %v269, 0
        %v283 = vsel %vm278, %v270, 0
        %v286 = vsel %vm278, %v271, 0
        %288 = vmatpush.msra.mxu0 0.0
        %289 = vmatpush.msra.mxu0 0.0
        %290 = vmatpush.msra.mxu0 0.0
        %291 = vmatpush.msra.mxu0 0.0
        %292 = vmatpush.msra.mxu0 0.0
        %293 = vmatpush.msra.mxu0 0.0
        %294 = vmatpush.msra.mxu0 0.0
        %295 = vmatpush.msra.mxu0 0.0
        %296 = vmatpush.msra.mxu0 0.0
        %297 = vmatpush.msra.mxu0 0.0
        %298 = vmatpush.msra.mxu0 0.0
        %299 = vmatpush.msra.mxu0 0.0
        %300 = vmatpush.msra.mxu0 0.0
        %301 = vmatpush.msra.mxu0 %v276
        %302 = vmatpush.msra.mxu0 %v274
        %303 = vmatpush.msra.mxu0 %v272
        %304 = vmatmul.f32.gmra.mxu0 %v280
        %v305 = vpop.f32.mrf.mxu0
        %v306 = vadd.f32 0.0, %v305
        %307 = vmatmul.f32.gmra.mxu0 %v283
        %v308 = vpop.f32.mrf.mxu0
        %v309 = vadd.f32 0.0, %v308
        %310 = vmatmul.f32.gmra.mxu0 %v286
        %v311 = vpop.f32.mrf.mxu0
        %v312 = vadd.f32 0.0, %v311
        %313 = vdwg.mxu0
        %314 = vmatpush.msra.mxu0 0.0
        %315 = vmatpush.msra.mxu0 0.0
        %316 = vmatpush.msra.mxu0 0.0
        %317 = vmatpush.msra.mxu0 0.0
        %318 = vmatpush.msra.mxu0 0.0
        %319 = vmatpush.msra.mxu0 0.0
        %320 = vmatpush.msra.mxu0 0.0
        %321 = vmatpush.msra.mxu0 0.0
        %322 = vmatpush.msra.mxu0 0.0
        %323 = vmatpush.msra.mxu0 0.0
        %324 = vmatpush.msra.mxu0 0.0
        %325 = vmatpush.msra.mxu0 0.0
        %326 = vmatpush.msra.mxu0 0.0
        %327 = vmatpush.msra.mxu0 %v277
        %328 = vmatpush.msra.mxu0 %v275
        %329 = vmatpush.msra.mxu0 %v273
        %330 = vmatmul.f32.gmra.mxu0 %v280
        %v331 = vpop.f32.mrf.mxu0
        %v332 = vadd.f32 0.0, %v331
        %333 = vmatmul.f32.gmra.mxu0 %v283
        %v334 = vpop.f32.mrf.mxu0
        %v335 = vadd.f32 0.0, %v334
        %336 = vmatmul.f32.gmra.mxu0 %v286
        %v337 = vpop.f32.mrf.mxu0
        %v338 = vadd.f32 0.0, %v337
        %339 = vdwg.mxu0
        %340 = vrot.lane.b32.xlu0 %v306, 112
        %v341 = vpop.permute.xlu0 %340
        %342 = vrot.lane.b32.xlu0 %v332, 112
        %v343 = vpop.permute.xlu0 %342
        %vm344 = vcmp.lt.s32.totalorder %v225, 112
        %v345 = vsel %vm344, %v341, %v343
        %v346 = vsel %vm344, %v343, %v341
        %347 = vrot.lane.b32.xlu0 %v306, 16
        %v348 = vpop.permute.xlu0 %347
        %349 = vrot.lane.b32.xlu0 %v332, 16
        %v350 = vpop.permute.xlu0 %349
        %v351 = vsel %vm233, %v348, %v350
        %v352 = vsel %vm233, %v350, %v348
        %v353 = vsel %vm233, 1, 0
        %v354 = vsel %vm234, 1, 0
        %vm355 = vcmp.eq.s32.totalorder %v353, 1
        %vm356 = vcmp.eq.s32.totalorder %v354, 1
        %v357 = vsel %vm355, %v345, %v352
        %v358 = vsel %vm356, %v346, %v351
        %v359 = vadd.f32 %v309, %v357
        %v360 = vadd.f32 %v335, %v358
        %361 = vrot.lane.b32.xlu0 %v312, 16
        %v362 = vpop.permute.xlu0 %361
        %363 = vrot.lane.b32.xlu0 %v338, 16
        %v364 = vpop.permute.xlu0 %363
        %v365 = vsel %vm233, %v362, %v364
        %v366 = vsel %vm233, %v364, %v362
        %367 = vrot.lane.b32.xlu0 %v312, 112
        %v368 = vpop.permute.xlu0 %367
        %369 = vrot.lane.b32.xlu0 %v338, 112
        %v370 = vpop.permute.xlu0 %369
        %v371 = vsel %vm344, %v368, %v370
        %v372 = vsel %vm344, %v370, %v368
        %v373 = vsel %vm235, 1, 0
        %v374 = vsel %vm236, 1, 0
        %vm375 = vcmp.eq.s32.totalorder %v373, 1
        %vm376 = vcmp.eq.s32.totalorder %v374, 1
        %v377 = vsel %vm375, %v366, %v371
        %v378 = vsel %vm376, %v365, %v372
        %v379 = vadd.f32 %v359, %v377
        %v380 = vadd.f32 %v360, %v378
        %v381 = vadd.f32 %v379, %v380
        %382 = vadd.xlane.f32.xlu0 %v381
        %v383 = vpop.xlane.xlu0 %382
        %v384 = vrcp.pop 256.0
        %v385 = vmul.f32 256.0, %v384
        %v386 = vsub.f32 1.0, %v385
        %v387 = vmul.f32 %v384, %v386
        %v388 = vadd.f32 %v384, %v387
        %vm389 = vweird.f32 %v384
        %v390 = vsel %vm389, %v384, %v388
        %v391 = vmul.f32 %v383, %v390
        %v392 = vmul.f32 %v379, %v379
        %v393 = vmul.f32 %v380, %v380
        %v394 = vadd.f32 %v392, %v393
        %395 = vadd.xlane.f32.xlu0 %v394
        %v396 = vpop.xlane.xlu0 %395
        %v397 = vmul.f32 %v396, %v390
        %v398 = vmul.f32 %v391, %v391
        %v399 = vsub.f32 %v397, %v398
        %v400 = vmax.f32 %v399, 0.0
        %v401 = vsub.f32 %v379, %v391
        %v402 = vsub.f32 %v380, %v391
        %v403 = vadd.f32 %v400, 1e-05
        %v404 = vrsqrt.pop %v403
        %v405 = vmul.f32 %v404, %v403
        %v406 = vmul.f32 %v405, %v404
        %v407 = vmul.f32 0.5, %v406
        %v408 = vsub.f32 1.5, %v407
        %v409 = vmul.f32 %v404, %v408
        %vm410 = vweird.f32 %v403
        %vm411 = vweird.f32 %v404
        %vm412 = vmor %vm410, %vm411
        %v413 = vsel %vm412, %v404, %v409
        %v414 = vmul.f32 %v401, %v413
        %v415 = vmul.f32 %v402, %v413
        %v416 = vmax.f32 %v414, 0.0
        %v417 = vmax.f32 %v415, 0.0
        %418 = vrot.lane.b32.xlu0 %v416, 127
        %v419 = vpop.permute.xlu0 %418
        %420 = vrot.lane.b32.xlu0 %v417, 127
        %v421 = vpop.permute.xlu0 %420
        %v422 = vsel %vm241, %v419, %v421
        %v423 = vsel %vm241, %v421, %v419
        %424 = vrot.lane.b32.xlu0 %v416, 1
        %v425 = vpop.permute.xlu0 %424
        %426 = vrot.lane.b32.xlu0 %v417, 1
        %v427 = vpop.permute.xlu0 %426
        %v428 = vsel %vm248, %v425, %v427
        %v429 = vsel %vm248, %v427, %v425
        %v430 = vsel %vm253, %v422, %v429
        %v431 = vsel %vm254, %v423, %v428
        %432 = vst [vmem:[#allocation2] sm:$0xff] %v430
        %433 = vst [vmem:[#allocation2 + $0x8] sm:$0xff] %v431
        %434 = vst [vmem:[#allocation2 + $0x10] sm:$0xff] %v416
        %435 = vst [vmem:[#allocation2 + $0x18] sm:$0xff] %v417
        %v436 = vsel %vm263, %v429, %v422
        %v437 = vsel %vm264, %v428, %v423
        %438 = vst [vmem:[#allocation2 + $0x20] sm:$0xff] %v436
        %439 = vst [vmem:[#allocation2 + $0x28] sm:$0xff] %v437
        %v440 = vld [vmem:[#allocation8] sm:$0xff]
        %v441 = vld [vmem:[#allocation8 + $0x8] sm:$0xff]
        %v442 = vld [vmem:[#allocation8 + $0x10] sm:$0xff]
        %v443 = vld [vmem:[#allocation2] sm:$0xff]
        %v444 = vld [vmem:[#allocation2 + $0x8] sm:$0xff]
        %v445 = vld [vmem:[#allocation2 + $0x10] sm:$0xff]
        %v446 = vld [vmem:[#allocation2 + $0x18] sm:$0xff]
        %v447 = vld [vmem:[#allocation2 + $0x20] sm:$0xff]
        %v448 = vld [vmem:[#allocation2 + $0x28] sm:$0xff]
        %v450 = vsel %vm278, %v440, 0
        %v453 = vsel %vm278, %v441, 0
        %v456 = vsel %vm278, %v442, 0
        %458 = vmatpush.msra.mxu0 0.0
        %459 = vmatpush.msra.mxu0 0.0
        %460 = vmatpush.msra.mxu0 0.0
        %461 = vmatpush.msra.mxu0 0.0
        %462 = vmatpush.msra.mxu0 0.0
        %463 = vmatpush.msra.mxu0 0.0
        %464 = vmatpush.msra.mxu0 0.0
        %465 = vmatpush.msra.mxu0 0.0
        %466 = vmatpush.msra.mxu0 0.0
        %467 = vmatpush.msra.mxu0 0.0
        %468 = vmatpush.msra.mxu0 0.0
        %469 = vmatpush.msra.mxu0 0.0
        %470 = vmatpush.msra.mxu0 0.0
        %471 = vmatpush.msra.mxu0 %v447
        %472 = vmatpush.msra.mxu0 %v445
        %473 = vmatpush.msra.mxu0 %v443
        %474 = vmatmul.f32.gmra.mxu0 %v450
        %v475 = vpop.f32.mrf.mxu0
        %v476 = vadd.f32 0.0, %v475
        %477 = vmatmul.f32.gmra.mxu0 %v453
        %v478 = vpop.f32.mrf.mxu0
        %v479 = vadd.f32 0.0, %v478
        %480 = vmatmul.f32.gmra.mxu0 %v456
        %v481 = vpop.f32.mrf.mxu0
        %v482 = vadd.f32 0.0, %v481
        %483 = vdwg.mxu0
        %484 = vmatpush.msra.mxu0 0.0
        %485 = vmatpush.msra.mxu0 0.0
        %486 = vmatpush.msra.mxu0 0.0
        %487 = vmatpush.msra.mxu0 0.0
        %488 = vmatpush.msra.mxu0 0.0
        %489 = vmatpush.msra.mxu0 0.0
        %490 = vmatpush.msra.mxu0 0.0
        %491 = vmatpush.msra.mxu0 0.0
        %492 = vmatpush.msra.mxu0 0.0
        %493 = vmatpush.msra.mxu0 0.0
        %494 = vmatpush.msra.mxu0 0.0
        %495 = vmatpush.msra.mxu0 0.0
        %496 = vmatpush.msra.mxu0 0.0
        %497 = vmatpush.msra.mxu0 %v448
        %498 = vmatpush.msra.mxu0 %v446
        %499 = vmatpush.msra.mxu0 %v444
        %500 = vmatmul.f32.gmra.mxu0 %v450
        %v501 = vpop.f32.mrf.mxu0
        %v502 = vadd.f32 0.0, %v501
        %503 = vmatmul.f32.gmra.mxu0 %v453
        %v504 = vpop.f32.mrf.mxu0
        %v505 = vadd.f32 0.0, %v504
        %506 = vmatmul.f32.gmra.mxu0 %v456
        %v507 = vpop.f32.mrf.mxu0
        %v508 = vadd.f32 0.0, %v507
        %509 = vdwg.mxu0
        %510 = vrot.lane.b32.xlu0 %v476, 112
        %v511 = vpop.permute.xlu0 %510
        %512 = vrot.lane.b32.xlu0 %v502, 112
        %v513 = vpop.permute.xlu0 %512
        %v514 = vsel %vm344, %v511, %v513
        %v515 = vsel %vm344, %v513, %v511
        %516 = vrot.lane.b32.xlu0 %v476, 16
        %v517 = vpop.permute.xlu0 %516
        %518 = vrot.lane.b32.xlu0 %v502, 16
        %v519 = vpop.permute.xlu0 %518
        %v520 = vsel %vm233, %v517, %v519
        %v521 = vsel %vm233, %v519, %v517
        %v522 = vsel %vm355, %v514, %v521
        %v523 = vsel %vm356, %v515, %v520
        %v524 = vadd.f32 %v479, %v522
        %v525 = vadd.f32 %v505, %v523
        %526 = vrot.lane.b32.xlu0 %v482, 16
        %v527 = vpop.permute.xlu0 %526
        %528 = vrot.lane.b32.xlu0 %v508, 16
        %v529 = vpop.permute.xlu0 %528
        %v530 = vsel %vm233, %v527, %v529
        %v531 = vsel %vm233, %v529, %v527
        %532 = vrot.lane.b32.xlu0 %v482, 112
        %v533 = vpop.permute.xlu0 %532
        %534 = vrot.lane.b32.xlu0 %v508, 112
        %v535 = vpop.permute.xlu0 %534
        %v536 = vsel %vm344, %v533, %v535
        %v537 = vsel %vm344, %v535, %v533
        %v538 = vsel %vm375, %v531, %v536
        %v539 = vsel %vm376, %v530, %v537
        %v540 = vadd.f32 %v524, %v538
        %v541 = vadd.f32 %v525, %v539
        %v542 = vadd.f32 %v540, %v541
        %543 = vadd.xlane.f32.xlu0 %v542
        %v544 = vpop.xlane.xlu0 %543
        %v545 = vmul.f32 %v544, %v390
        %v546 = vmul.f32 %v540, %v540
        %v547 = vmul.f32 %v541, %v541
        %v548 = vadd.f32 %v546, %v547
        %549 = vadd.xlane.f32.xlu0 %v548
        %v550 = vpop.xlane.xlu0 %549
        %v551 = vmul.f32 %v550, %v390
        %v552 = vmul.f32 %v545, %v545
        %v553 = vsub.f32 %v551, %v552
        %v554 = vmax.f32 %v553, 0.0
        %v555 = vsub.f32 %v540, %v545
        %v556 = vsub.f32 %v541, %v545
        %v557 = vadd.f32 %v554, 1e-05
        %v558 = vrsqrt.pop %v557
        %v559 = vmul.f32 %v558, %v557
        %v560 = vmul.f32 %v559, %v558
        %v561 = vmul.f32 0.5, %v560
        %v562 = vsub.f32 1.5, %v561
        %v563 = vmul.f32 %v558, %v562
        %vm564 = vweird.f32 %v557
        %vm565 = vweird.f32 %v558
        %vm566 = vmor %vm564, %vm565
        %v567 = vsel %vm566, %v558, %v563
        %v568 = vmul.f32 %v555, %v567
        %v569 = vmul.f32 %v556, %v567
        %v570 = vadd.f32 %v222, %v568
        %v571 = vadd.f32 %v223, %v569
        %572 = vst [vmem:[%s221] sm:$0xff] %v570
        %573 = vst [vmem:[%s221 + $0x8] sm:$0xff] %v571
        %s574 = sand.u32 %s97, 1
        %s575 = scalar_lea.sflag [#allocation5], %s574
        %s576 = sand.u32 %s97, 1
        %s577 = smul.addr %s576, 16
        %s578 = scalar_lea.vmem [#allocation9], %s577
        // Predicated region
        $region45: #{tpu_custom_call.1} parent=31 // pred_check
          %p579 = pneg %p107
        $region46: #{tpu_custom_call.1} parent=31 // pred_check_branch
          %581 = sbr.rel (%p579) target = $region48
        $region47: #{tpu_custom_call.1} parent=31 // pred_region
          %583 = vsyncadd %s575, 0
          %s584 = smul.addr %s21, 2
          %s585 = smul.addr %s584, 8
          %s586 = scalar_lea.hbm %s3, %s585
          %s588 = sshll.u32 %s578, 4
          %s589 = int_to_ptr.vmem [resolvable:$true] %s588
          %s590 = sshll.u32 %s586, 4
          %s591 = int_to_ptr.hbm [resolvable:$true] %s590
          %593 = dma.vmem_to_hbm [thread:$0]  %s589, 256, %s591, %s575
        $region48: #{tpu_custom_call.1} parent=31 // pred_fallthru
          _
      $region32: #{tpu_custom_call.1} parent=5 // pred_fallthru
        _
      %p594 = scmp.le.s32.totalorder 2, %s16
      // Predicated region
      $region49: #{tpu_custom_call.1} parent=5 // pred_check
        %p595 = pneg %p594
      $region50: #{tpu_custom_call.1} parent=5 // pred_check_branch
        %597 = sbr.rel (%p595) target = $region52
      $region51: #{tpu_custom_call.1} parent=5 // pred_region
        %s598 = ssub.s32 %s16, 2
        // Predicated region
        $region53: #{tpu_custom_call.1} parent=51 // pred_check
          %p599 = pneg %p113
        $region54: #{tpu_custom_call.1} parent=51 // pred_check_branch
          %601 = sbr.rel (%p599) target = $region56
        $region55: #{tpu_custom_call.1} parent=51 // pred_region
          %s602 = sand.u32 %s98, 1
          %s603 = scalar_lea.sflag [#allocation5], %s602
          %s604 = sand.u32 %s98, 1
          %s605 = smul.addr %s604, 16
          %s606 = scalar_lea.vmem [#allocation9], %s605
          %608 = dma.done %s603, 256
        $region56: #{tpu_custom_call.1} parent=51 // pred_fallthru
          _
      $region52: #{tpu_custom_call.1} parent=5 // pred_fallthru
        _
    $region6: #{tpu_custom_call.1} parent=1 // loop_footer
      %s20 = sadd.s32 1, %s16
    $region7: #{tpu_custom_call.1} parent=1 // loop_footer_branch
      %15 = sbr.rel target = $region3
    $region8: #{tpu_custom_call.1} parent=1 // loop_exit
      _
    %609 = vsyncpa [#allocation4], 1
    %s610 = scalar_lea.sflag [#allocation4], 1
    %611 = vsyncpa %s610, 1
    %612 = vsyncpa [#allocation7], 1
    %613 = vsyncpa [#allocation5], 1
    %s614 = scalar_lea.sflag [#allocation5], 1
    %615 = vsyncpa %s614, 1

</llo_original>
